<compile_context>
chip_gen: v7x
topology: tpu7x:2x2x1
jax: 0.10.0
libtpu: 0.0.40
codegen_flags: <defaults>
</compile_context>

<pallas_src>
import functools

import jax
import jax.numpy as jnp
from jax import lax
from jax.experimental import pallas as pl
from jax.experimental.pallas import tpu as pltpu
import numpy as np

_LANE = 128
_ROW_ALIGN = 32  # covers f32 (8), bf16 (16) and int8 (32) sublane packing


def _round_up(x, m):
    return ((x + m - 1) // m) * m


def _phrase_type_kernel(ids_ref, emb_ref, table_ref, out_ref, *,
                        valid_rows, compute_dtype):
    """Vectorized gather + add on one (tm, H) row block.

    ids_ref   : VMEM [tm, 1]    int8/int32 phrase-type ids for this row block
    emb_ref   : VMEM [tm, H]    phrase-embedding block
    table_ref : VMEM [Tpad, H]  full (row-padded) attribute table, resident
    out_ref   : VMEM [tm, H]
    """
    ids = ids_ref[...].astype(jnp.int32)          # (tm, 1)
    emb = emb_ref[...].astype(compute_dtype)      # (tm, H)   no-op if already compute_dtype
    tab = table_ref[...].astype(compute_dtype)    # (Tpad, H)

    tm, h = emb.shape
    tpad = tab.shape[0]

    if valid_rows <= 8:
        # Tiny table: broadcast compare + select chain (pure VPU, hides under DMA).
        gathered = jnp.zeros((tm, h), dtype=compute_dtype)
        for t in range(valid_rows):               # static unroll, small
            gathered = jnp.where(ids == t, tab[t:t + 1, :], gathered)
    else:
        # Larger table: one-hot [tm, Tpad] @ [Tpad, H] gather on the (idle) MXU.
        t_iota = lax.broadcasted_iota(jnp.int32, (tm, tpad), 1)
        onehot = (ids == t_iota).astype(compute_dtype)
        gathered = jnp.dot(onehot, tab,
                           preferred_element_type=jnp.float32).astype(compute_dtype)

    out_ref[...] = (emb + gathered).astype(out_ref.dtype)  # one unmasked full-block store


def phrase_type_encoder_forward(batch_phrase_emb, phrase_type_ids, table, *,
                                target_block_bytes=2 * 1024 * 1024):
    """batch_phrase_emb: [B, S, H] float32/bfloat16
       phrase_type_ids : [B, S] int (values in [0, T], T = table.shape[0]-1)
       table           : [T+1, H] float (phrase_attribute_emb_all)
    Returns [B, S, H] with out = batch_phrase_emb + table[phrase_type_ids]."""
    B, S, H = batch_phrase_emb.shape
    N = B * S
    Tp1, Ht = table.shape
    assert Ht == H, "table hidden size must match embeddings"

    emb_dtype = batch_phrase_emb.dtype
    compute_dtype = (jnp.bfloat16 if jnp.dtype(emb_dtype) == jnp.dtype(jnp.bfloat16)
                     else jnp.float32)

    # --- ids: clamp + narrow -------------------------------------------------
    # Out-of-range ids map onto the last ("other") row instead of reading
    # adjacent VMEM (PyTorch semantics would be an index error).
    ids = jnp.clip(phrase_type_ids.reshape(N).astype(jnp.int32), 0, Tp1 - 1)
    ids_dtype = jnp.int8 if Tp1 <= 127 else jnp.int32   # 4x smaller ids tile/HBM read
    ids2d = ids.astype(ids_dtype).reshape(N, 1)

    # --- table: pad rows to a sublane multiple; extra zero rows never selected
    Tpad = max(8, _round_up(Tp1, 8))
    if Tpad != Tp1:
        table_p = jnp.zeros((Tpad, H), dtype=table.dtype).at[:Tp1, :].set(table)
    else:
        table_p = table

    # --- row tile: byte-targeted; ragged last block handled by Pallas --------
    emb_row_bytes = _round_up(H, _LANE) * jnp.dtype(emb_dtype).itemsize
    tm_target = max(_ROW_ALIGN,
                    (target_block_bytes // emb_row_bytes) // _ROW_ALIGN * _ROW_ALIGN)
    # Keep >= ~4 grid steps when N allows (megacore sharding on v7x).
    tm_cap = max(_ROW_ALIGN, _round_up(pl.cdiv(N, 4), _ROW_ALIGN))
    tm_eff = min(tm_target, tm_cap)
    if tm_eff >= N:
        tm_eff = N          # single block == full array dims (always a legal block)
    grid = (pl.cdiv(N, tm_eff),)

    # --- VMEM budget (double-buffered blocks); safe on v5e/v6e/v7x -----------
    ids_row_vmem = _LANE * jnp.dtype(ids_dtype).itemsize      # lane-padded row
    table_bytes = Tpad * _round_up(H, _LANE) * jnp.dtype(table.dtype).itemsize
    working = 2 * (2 * tm_eff * emb_row_bytes          # emb in + out blocks
                   + tm_eff * ids_row_vmem             # ids block
                   + table_bytes)                      # resident table
    vmem_limit = int(min(48 << 20, max(2 * working, 16 << 20)))

    kernel = functools.partial(_phrase_type_kernel,
                               valid_rows=Tp1, compute_dtype=compute_dtype)

    out_flat = pl.pallas_call(
        kernel,
        out_shape=jax.ShapeDtypeStruct((N, H), emb_dtype),
        grid_spec=pl.GridSpec(
            grid=grid,
            in_specs=[
                # phrase-type ids: one (tm, 1) block per grid step
                pl.BlockSpec((tm_eff, 1), lambda i: (i, 0)),
                # phrase embeddings: one (tm, H) row block per grid step
                pl.BlockSpec((tm_eff, H), lambda i: (i, 0)),
                # full (row-padded) attribute table, same block every step
                pl.BlockSpec((Tpad, H), lambda i: (0, 0)),
            ],
            out_specs=pl.BlockSpec((tm_eff, H), lambda i: (i, 0)),
        ),
        compiler_params=pltpu.CompilerParams(
            dimension_semantics=("parallel",),
            vmem_limit_bytes=vmem_limit,
        ),
    )(ids2d, batch_phrase_emb.reshape(N, H), table_p)

    return out_flat.reshape(B, S, H)


if __name__ == "__main__":
    def _ref(emb, ids, table):
        return emb + table[jnp.clip(ids, 0, table.shape[0] - 1)]

    def _check(out, ref, tol):
        np.testing.assert_allclose(np.asarray(out, dtype=np.float32),
                                   np.asarray(ref, dtype=np.float32),
                                   rtol=tol, atol=tol)

    key = jax.random.PRNGKey(0)

    # --- test 1: f32, tiny table (select-chain path), single full block ------
    B, S, H, num_types = 2, 8, 128, 4
    k1, k2, k3, key = jax.random.split(key, 4)
    attr = jax.random.normal(k2, (num_types, H), dtype=jnp.float32)
    table_all = jnp.concatenate([attr, jnp.zeros((1, H), jnp.float32)], axis=0)
    emb = jax.random.normal(k1, (B, S, H), dtype=jnp.float32)
    ids = jax.random.randint(k3, (B, S), 0, num_types + 1, dtype=jnp.int32)
    out = jax.block_until_ready(phrase_type_encoder_forward(emb, ids, table_all))
    _check(out, _ref(emb, ids, table_all), 1e-6)

    # --- test 2: bf16, larger table (one-hot / MXU path), odd N --------------
    B, S, H, num_types = 3, 7, 128, 12
    k1, k2, k3, key = jax.random.split(key, 4)
    attr = jax.random.normal(k2, (num_types, H), dtype=jnp.bfloat16)
    table_all = jnp.concatenate([attr, jnp.zeros((1, H), jnp.bfloat16)], axis=0)
    emb = jax.random.normal(k1, (B, S, H), dtype=jnp.bfloat16)
    ids = jax.random.randint(k3, (B, S), 0, num_types + 1, dtype=jnp.int32)
    out = jax.block_until_ready(phrase_type_encoder_forward(emb, ids, table_all))
    _check(out, _ref(emb, ids, table_all), 1e-2)

    # --- test 3: f32, one-hot path, multi-block grid with ragged last block --
    B, S, H, num_types = 4, 100, 128, 12
    k1, k2, k3, key = jax.random.split(key, 4)
    attr = jax.random.normal(k2, (num_types, H), dtype=jnp.float32)
    table_all = jnp.concatenate([attr, jnp.zeros((1, H), jnp.float32)], axis=0)
    emb = jax.random.normal(k1, (B, S, H), dtype=jnp.float32)
    ids = jax.random.randint(k3, (B, S), 0, num_types + 1, dtype=jnp.int32)
    out = jax.block_until_ready(phrase_type_encoder_forward(emb, ids, table_all))
    _check(out, _ref(emb, ids, table_all), 1e-6)

    print("KERNEL_OK")
</pallas_src>

<mosaic_0001>
module attributes {stable_mosaic.version = 11 : i64} {
  func.func @_phrase_type_kernel(%arg0: i32, %arg1: memref<16x1xi8, #tpu.memory_space<vmem>>, %arg2: memref<16x128xf32, #tpu.memory_space<vmem>>, %arg3: memref<8x128xf32, #tpu.memory_space<vmem>>, %arg4: memref<16x128xf32, #tpu.memory_space<vmem>>) attributes {dimension_semantics = [#tpu.dimension_semantics<parallel>], iteration_bounds = array<i64: 1>, scalar_prefetch = 0 : i64, scratch_operands = 0 : i64, tpu.core_type = #tpu.core_type<tc>, window_params = [{transform_indices = @transform_0, window_bounds = array<i64: 16, 1>}, {transform_indices = @transform_1, window_bounds = array<i64: 16, 128>}, {pipeline_mode = #tpu.pipeline_mode<synchronous>, transform_indices = @transform_2, window_bounds = array<i64: 8, 128>}, {transform_indices = @transform_3, window_bounds = array<i64: 16, 128>}]} {
    %c0 = arith.constant 0 : index
    %c0_0 = arith.constant 0 : index
    %0 = vector.load %arg1[%c0, %c0_0] : memref<16x1xi8, #tpu.memory_space<vmem>>, vector<16x1xi8>
    %1 = arith.extsi %0 : vector<16x1xi8> to vector<16x1xi32>
    %c0_1 = arith.constant 0 : index
    %c0_2 = arith.constant 0 : index
    %2 = vector.load %arg2[%c0_1, %c0_2] : memref<16x128xf32, #tpu.memory_space<vmem>>, vector<16x128xf32>
    %c0_3 = arith.constant 0 : index
    %c0_4 = arith.constant 0 : index
    %3 = vector.load %arg3[%c0_3, %c0_4] : memref<8x128xf32, #tpu.memory_space<vmem>>, vector<8x128xf32>
    %cst = arith.constant 0.000000e+00 : f32
    %4 = vector.broadcast %cst : f32 to vector<16x128xf32>
    %c0_i32 = arith.constant 0 : i32
    %5 = vector.broadcast %c0_i32 : i32 to vector<16x1xi32>
    %6 = arith.cmpi eq, %1, %5 : vector<16x1xi32>
    %7 = vector.extract_strided_slice %3 {offsets = [0, 0], sizes = [1, 128], strides = [1, 1]} : vector<8x128xf32> to vector<1x128xf32>
    %8 = vector.shape_cast %6 : vector<16x1xi1> to vector<16x1xi1>
    %9 = vector.broadcast %8 : vector<16x1xi1> to vector<16x128xi1>
    %10 = vector.shape_cast %7 : vector<1x128xf32> to vector<1x128xf32>
    %11 = vector.broadcast %10 : vector<1x128xf32> to vector<16x128xf32>
    %12 = arith.select %9, %11, %4 : vector<16x128xi1>, vector<16x128xf32>
    %c1_i32 = arith.constant 1 : i32
    %13 = vector.broadcast %c1_i32 : i32 to vector<16x1xi32>
    %14 = arith.cmpi eq, %1, %13 : vector<16x1xi32>
    %15 = vector.extract_strided_slice %3 {offsets = [1, 0], sizes = [1, 128], strides = [1, 1]} : vector<8x128xf32> to vector<1x128xf32>
    %16 = vector.shape_cast %14 : vector<16x1xi1> to vector<16x1xi1>
    %17 = vector.broadcast %16 : vector<16x1xi1> to vector<16x128xi1>
    %18 = vector.shape_cast %15 : vector<1x128xf32> to vector<1x128xf32>
    %19 = vector.broadcast %18 : vector<1x128xf32> to vector<16x128xf32>
    %20 = arith.select %17, %19, %12 : vector<16x128xi1>, vector<16x128xf32>
    %c2_i32 = arith.constant 2 : i32
    %21 = vector.broadcast %c2_i32 : i32 to vector<16x1xi32>
    %22 = arith.cmpi eq, %1, %21 : vector<16x1xi32>
    %23 = vector.extract_strided_slice %3 {offsets = [2, 0], sizes = [1, 128], strides = [1, 1]} : vector<8x128xf32> to vector<1x128xf32>
    %24 = vector.shape_cast %22 : vector<16x1xi1> to vector<16x1xi1>
    %25 = vector.broadcast %24 : vector<16x1xi1> to vector<16x128xi1>
    %26 = vector.shape_cast %23 : vector<1x128xf32> to vector<1x128xf32>
    %27 = vector.broadcast %26 : vector<1x128xf32> to vector<16x128xf32>
    %28 = arith.select %25, %27, %20 : vector<16x128xi1>, vector<16x128xf32>
    %c3_i32 = arith.constant 3 : i32
    %29 = vector.broadcast %c3_i32 : i32 to vector<16x1xi32>
    %30 = arith.cmpi eq, %1, %29 : vector<16x1xi32>
    %31 = vector.extract_strided_slice %3 {offsets = [3, 0], sizes = [1, 128], strides = [1, 1]} : vector<8x128xf32> to vector<1x128xf32>
    %32 = vector.shape_cast %30 : vector<16x1xi1> to vector<16x1xi1>
    %33 = vector.broadcast %32 : vector<16x1xi1> to vector<16x128xi1>
    %34 = vector.shape_cast %31 : vector<1x128xf32> to vector<1x128xf32>
    %35 = vector.broadcast %34 : vector<1x128xf32> to vector<16x128xf32>
    %36 = arith.select %33, %35, %28 : vector<16x128xi1>, vector<16x128xf32>
    %c4_i32 = arith.constant 4 : i32
    %37 = vector.broadcast %c4_i32 : i32 to vector<16x1xi32>
    %38 = arith.cmpi eq, %1, %37 : vector<16x1xi32>
    %39 = vector.extract_strided_slice %3 {offsets = [4, 0], sizes = [1, 128], strides = [1, 1]} : vector<8x128xf32> to vector<1x128xf32>
    %40 = vector.shape_cast %38 : vector<16x1xi1> to vector<16x1xi1>
    %41 = vector.broadcast %40 : vector<16x1xi1> to vector<16x128xi1>
    %42 = vector.shape_cast %39 : vector<1x128xf32> to vector<1x128xf32>
    %43 = vector.broadcast %42 : vector<1x128xf32> to vector<16x128xf32>
    %44 = arith.select %41, %43, %36 : vector<16x128xi1>, vector<16x128xf32>
    %45 = arith.addf %2, %44 : vector<16x128xf32>
    %c0_5 = arith.constant 0 : index
    %c0_6 = arith.constant 0 : index
    %46 = vector.load %arg4[%c0_5, %c0_6] : memref<16x128xf32, #tpu.memory_space<vmem>>, vector<16x128xf32>
    tpu.vector_store %arg4[%c0_5, %c0_6], %45 {strides = array<i32>} : memref<16x128xf32, #tpu.memory_space<vmem>>, vector<16x128xf32>,
    return
  }
  func.func @transform_0(%arg0: i32) -> (i32, i32) {
    %c0_i32 = arith.constant 0 : i32
    %c0_i32_0 = arith.constant 0 : i32
    return %arg0, %c0_i32 : i32, i32
  }
  func.func @transform_1(%arg0: i32) -> (i32, i32) {
    %c0_i32 = arith.constant 0 : i32
    %c0_i32_0 = arith.constant 0 : i32
    return %arg0, %c0_i32 : i32, i32
  }
  func.func @transform_2(%arg0: i32) -> (i32, i32) {
    %c0_i32 = arith.constant 0 : i32
    %c0_i32_0 = arith.constant 0 : i32
    %c0_i32_1 = arith.constant 0 : i32
    return %c0_i32, %c0_i32_0 : i32, i32
  }
  func.func @transform_3(%arg0: i32) -> (i32, i32) {
    %c0_i32 = arith.constant 0 : i32
    %c0_i32_0 = arith.constant 0 : i32
    return %arg0, %c0_i32 : i32, i32
  }
}

</mosaic_0001>

<llo_original>
// kernel: tpu_custom_call.1
$region0: #{tpu_custom_call.1}
  #allocation0 [shape = 'u32[]', space=smem, size = 0x4, offset = 0x4, fixed_abs, tag = 'smem constant byte address 0x4 - core index']
  #allocation1 [shape = 'u32[144,128]{1,0:T(1,128)}', space=vmem, size = 0x12000, scoped, tag = 'internal scratch']
  %s0 = inlined_call_operand.vmem [shape: s8[16,1], index: 0, kind: input, shape index: {}]
  %s1 = inlined_call_operand.hbm [shape: f32[16,128], index: 1, kind: input, shape index: {}]
  %s2 = inlined_call_operand.vmem [shape: f32[8,128], index: 2, kind: input, shape index: {}]
  %s3 = inlined_call_operand.hbm [shape: f32[16,128], index: 3, kind: output, shape index: {}]
  %s4 = sld [smem:[#allocation0]]
  $region26: #{tpu_custom_call.1} parent=0
    _
  %s6 = ssub.s32 1, %s4
  %s7 = scalar_select 0, %s6, %s4
  $region1: #{tpu_custom_call.1} parent=0
    #allocation2 [shape = 'u8[8192]{0}', space=vmem, size = 0x2000, scoped, tag = 'input window, operand 1, single buffered']
    #allocation3 [shape = 's32[1]{0}', space=sflag, size = 0x4, scoped, tag = 'scoped memory for tpu_custom_call.1']
    #allocation4 [shape = 's32[1]{0}', space=sflag, size = 0x4, scoped, tag = 'scoped memory for tpu_custom_call.1']
    #allocation5 [shape = 'u8[8192]{0}', space=vmem, size = 0x2000, scoped, tag = 'output window, operand 0, single buffered']
    %8 = vsyncpa [#allocation3], 0
    %9 = vsyncpa [#allocation4], 0
    // Predicated region
    $region2: #{tpu_custom_call.1} parent=1 // pred_check
      _
    $region3: #{tpu_custom_call.1} parent=1 // pred_check_branch
      %11 = sbr.rel (0) target = $region5
    $region4: #{tpu_custom_call.1} parent=1 // pred_region
      _
    $region5: #{tpu_custom_call.1} parent=1 // pred_fallthru
      _
    // Predicated region
    $region6: #{tpu_custom_call.1} parent=1 // pred_check
      _
    $region7: #{tpu_custom_call.1} parent=1 // pred_check_branch
      %13 = sbr.rel (0) target = $region9
    $region8: #{tpu_custom_call.1} parent=1 // pred_region
      %s15 = ssub.s32 256, 256
      %16 = vsyncadd [#allocation3], %s15
      %s17 = sshll.u32 [#allocation2], 4
      %s18 = int_to_ptr.vmem [resolvable:$true] %s17
      %23 = dma.hbm_to_vmem [thread:$0]  %s1, 256, %s18, [#allocation3], 128, 128, 8
    $region9: #{tpu_custom_call.1} parent=1 // pred_fallthru
      _
    // Predicated region
    $region10: #{tpu_custom_call.1} parent=1 // pred_check
      _
    $region11: #{tpu_custom_call.1} parent=1 // pred_check_branch
      %25 = sbr.rel (0) target = $region13
    $region12: #{tpu_custom_call.1} parent=1 // pred_region
      _
    $region13: #{tpu_custom_call.1} parent=1 // pred_fallthru
      _
    // Predicated region
    $region14: #{tpu_custom_call.1} parent=1 // pred_check
      _
    $region15: #{tpu_custom_call.1} parent=1 // pred_check_branch
      %27 = sbr.rel (0) target = $region17
    $region16: #{tpu_custom_call.1} parent=1 // pred_region
      %28 = dma.done [#allocation3], 256
    $region17: #{tpu_custom_call.1} parent=1 // pred_fallthru
      _
    %v29 = vld [vmem:[%s0] sm:$0x3]
    %v30 = vld [vmem:[%s0 + $0x2] sm:$0x3]
    %v31 = vunpack.c.0.s8 %v29
    %v32 = vunpack.c.0.s8 %v30
    %v33 = vld [vmem:[#allocation2] sm:$0xff]
    %v34 = vld [vmem:[#allocation2 + $0x8] sm:$0xff]
    %v35 = vld [vmem:[%s2] sm:$0xff]
    %vm36 = vcmp.eq.s32.totalorder %v31, 0
    %vm37 = vcmp.eq.s32.totalorder %v32, 0
    %v38 = vsel %vm36, 1, 0
    %v39 = vsel %vm37, 1, 0
    %40 = vset.pattern.permute.xlu0 0
    %41 = vperm.xlu0 %40, %v38
    %v42 = vpop.permute.xlu0 %41
    %43 = vset.pattern.permute.xlu0 0
    %44 = vperm.xlu0 %43, %v39
    %v45 = vpop.permute.xlu0 %44
    %vm46 = vcmp.eq.s32.totalorder %v42, 1
    %vm47 = vcmp.eq.s32.totalorder %v45, 1
    %v48 = vlaneseq
    %v49 = vshrl.u32 %v48, 7
    %v50 = vsub.s32 0, %v49
    %v51 = vrot.slane %v35, %v50
    %v52 = vsel %vm46, %v51, 0.0
    %v53 = vsel %vm47, %v51, 0.0
    %vm54 = vcmp.eq.s32.totalorder %v31, 1
    %vm55 = vcmp.eq.s32.totalorder %v32, 1
    %v56 = vsel %vm54, 1, 0
    %v57 = vsel %vm55, 1, 0
    %58 = vset.pattern.permute.xlu0 0
    %59 = vperm.xlu0 %58, %v56
    %v60 = vpop.permute.xlu0 %59
    %61 = vset.pattern.permute.xlu0 0
    %62 = vperm.xlu0 %61, %v57
    %v63 = vpop.permute.xlu0 %62
    %vm64 = vcmp.eq.s32.totalorder %v60, 1
    %vm65 = vcmp.eq.s32.totalorder %v63, 1
    %v66 = vlaneseq
    %v67 = vshrl.u32 %v66, 7
    %v68 = vsub.s32 1, %v67
    %v69 = vrot.slane %v35, %v68
    %v70 = vsel %vm64, %v69, %v52
    %v71 = vsel %vm65, %v69, %v53
    %vm72 = vcmp.eq.s32.totalorder %v31, 2
    %vm73 = vcmp.eq.s32.totalorder %v32, 2
    %v74 = vsel %vm72, 1, 0
    %v75 = vsel %vm73, 1, 0
    %76 = vset.pattern.permute.xlu0 0
    %77 = vperm.xlu0 %76, %v74
    %v78 = vpop.permute.xlu0 %77
    %79 = vset.pattern.permute.xlu0 0
    %80 = vperm.xlu0 %79, %v75
    %v81 = vpop.permute.xlu0 %80
    %vm82 = vcmp.eq.s32.totalorder %v78, 1
    %vm83 = vcmp.eq.s32.totalorder %v81, 1
    %v84 = vlaneseq
    %v85 = vshrl.u32 %v84, 7
    %v86 = vsub.s32 2, %v85
    %v87 = vrot.slane %v35, %v86
    %v88 = vsel %vm82, %v87, %v70
    %v89 = vsel %vm83, %v87, %v71
    %vm90 = vcmp.eq.s32.totalorder %v31, 3
    %vm91 = vcmp.eq.s32.totalorder %v32, 3
    %v92 = vsel %vm90, 1, 0
    %v93 = vsel %vm91, 1, 0
    %94 = vset.pattern.permute.xlu0 0
    %95 = vperm.xlu0 %94, %v92
    %v96 = vpop.permute.xlu0 %95
    %97 = vset.pattern.permute.xlu0 0
    %98 = vperm.xlu0 %97, %v93
    %v99 = vpop.permute.xlu0 %98
    %vm100 = vcmp.eq.s32.totalorder %v96, 1
    %vm101 = vcmp.eq.s32.totalorder %v99, 1
    %v102 = vlaneseq
    %v103 = vshrl.u32 %v102, 7
    %v104 = vsub.s32 3, %v103
    %v105 = vrot.slane %v35, %v104
    %v106 = vsel %vm100, %v105, %v88
    %v107 = vsel %vm101, %v105, %v89
    %vm108 = vcmp.eq.s32.totalorder %v31, 4
    %vm109 = vcmp.eq.s32.totalorder %v32, 4
    %v110 = vsel %vm108, 1, 0
    %v111 = vsel %vm109, 1, 0
    %112 = vset.pattern.permute.xlu0 0
    %113 = vperm.xlu0 %112, %v110
    %v114 = vpop.permute.xlu0 %113
    %115 = vset.pattern.permute.xlu0 0
    %116 = vperm.xlu0 %115, %v111
    %v117 = vpop.permute.xlu0 %116
    %vm118 = vcmp.eq.s32.totalorder %v114, 1
    %vm119 = vcmp.eq.s32.totalorder %v117, 1
    %v120 = vlaneseq
    %v121 = vshrl.u32 %v120, 7
    %v122 = vsub.s32 4, %v121
    %v123 = vrot.slane %v35, %v122
    %v124 = vsel %vm118, %v123, %v106
    %v125 = vsel %vm119, %v123, %v107
    %v126 = vadd.f32 %v33, %v124
    %v127 = vadd.f32 %v34, %v125
    %128 = vst [vmem:[#allocation5] sm:$0xff] %v126
    %129 = vst [vmem:[#allocation5 + $0x8] sm:$0xff] %v127
    // Predicated region
    $region18: #{tpu_custom_call.1} parent=1 // pred_check
      _
    $region19: #{tpu_custom_call.1} parent=1 // pred_check_branch
      %131 = sbr.rel (0) target = $region21
    $region20: #{tpu_custom_call.1} parent=1 // pred_region
      %s133 = ssub.s32 256, 256
      %134 = vsyncadd [#allocation4], %s133
      %s135 = sshll.u32 [#allocation5], 4
      %s136 = int_to_ptr.vmem [resolvable:$true] %s135
      %141 = dma.vmem_to_hbm [thread:$0]  %s136, 256, %s3, [#allocation4], 128, 128, 8
    $region21: #{tpu_custom_call.1} parent=1 // pred_fallthru
      _
    // Predicated region
    $region22: #{tpu_custom_call.1} parent=1 // pred_check
      _
    $region23: #{tpu_custom_call.1} parent=1 // pred_check_branch
      %143 = sbr.rel (0) target = $region25
    $region24: #{tpu_custom_call.1} parent=1 // pred_region
      %144 = dma.done [#allocation4], 256
    $region25: #{tpu_custom_call.1} parent=1 // pred_fallthru
      _
    %145 = vsyncpa [#allocation3], 1
    %146 = vsyncpa [#allocation4], 1

</llo_original>
